<compile_context>
chip_gen: v5e
topology: v5e:2x2
jax: 0.10.0
libtpu: 0.0.40
codegen_flags: <defaults>
</compile_context>

<pallas_src>
import jax
import jax.numpy as jnp
import numpy as np
from jax import lax
from jax.experimental import pallas as pl
from jax.experimental.pallas import tpu as pltpu

# ------------------------- problem sizes -------------------------
N, CIN, H, W = 2, 4, 16, 16
KSIZE = 3
EXPAND_RATIO = 4
CEXP = CIN * EXPAND_RATIO        # 16
COUT = CIN                       # 4  (has_shortcut requires input_c == out_c)
EPS = 1e-5
M = N * H * W                    # 512 output positions (lane axis, 4 x 128)
K1 = KSIZE * KSIZE * CIN         # 36 im2col features
K1B = K1 + 1                     # 37: + ones row so BN1 bias rides the matmul

assert H & (H - 1) == 0 and W & (W - 1) == 0, "index decode uses pow2 H, W"
LOG2_W = W.bit_length() - 1


# ------------------------- Pallas kernel -------------------------
def fused_mbconv_kernel(x_ref, w1_ref, w2_ref, b2_ref, o_ref):
    x = x_ref[...]                         # (CIN, M)   lane-dense flat input (== residual)

    # Decode lane position m = n*H*W + y*W + x (H, W are powers of two).
    m_idx = lax.broadcasted_iota(jnp.int32, (1, M), 1)
    xc = m_idx & (W - 1)                   # x coordinate
    yc = (m_idx >> LOG2_W) & (H - 1)       # y coordinate

    # In-kernel im2col for the 3x3 expand conv: each tap is a circular lane roll
    # (XLU) of the unpadded input, with a SAME-padding border mask that also
    # zeroes every lane where the roll wrapped (image edge / batch boundary).
    patches = []
    for kh in range(KSIZE):
        for kw in range(KSIZE):
            dy, dx = kh - 1, kw - 1
            d = dy * W + dx                # static flat shift
            if d == 0:
                patches.append(x)
                continue
            shifted = pltpu.roll(x, shift=(-d) % M, axis=1)   # shifted[i] == x[i+d] (circ.)
            conds = []
            if dx > 0:
                conds.append(xc <= W - 1 - dx)
            elif dx < 0:
                conds.append(xc >= -dx)
            if dy > 0:
                conds.append(yc <= H - 1 - dy)
            elif dy < 0:
                conds.append(yc >= -dy)
            valid = conds[0]
            for c in conds[1:]:
                valid = valid & c
            patches.append(jnp.where(valid, shifted, 0.0))    # (CIN, M)
    patches.append(jnp.ones((1, M), jnp.float32))             # bias row
    p = jnp.concatenate(patches, axis=0)                      # (K1B, M)

    # Expand conv + folded BN1 (+bias via ones row) in ONE MXU pass, then SiLU.
    h = jnp.dot(w1_ref[...], p, preferred_element_type=jnp.float32)   # (CEXP, M)
    h = h * jax.nn.sigmoid(h)                                         # SiLU (EUP)

    # Project 1x1 conv + folded BN2 (Identity activation).
    z = jnp.dot(w2_ref[...], h, preferred_element_type=jnp.float32)   # (COUT, M)
    z = z + b2_ref[...]

    # Shortcut (drop_path is identity: eval mode / drop_rate == 0).
    o_ref[...] = (z + x).astype(o_ref.dtype)


def fused_mbconv_pallas(x_t, w1b, w2t, b2):
    return pl.pallas_call(
        fused_mbconv_kernel,
        out_shape=jax.ShapeDtypeStruct((COUT, M), jnp.float32),
        grid_spec=pltpu.PrefetchScalarGridSpec(
            num_scalar_prefetch=0,
            grid=(1,),                                        # whole problem fits VMEM
            in_specs=[
                pl.BlockSpec((CIN, M),     lambda i: (0, 0)),  # flat input (lane-dense)
                pl.BlockSpec((CEXP, K1B),  lambda i: (0, 0)),  # expand weight + bn1 bias col
                pl.BlockSpec((COUT, CEXP), lambda i: (0, 0)),  # project weight (scale folded)
                pl.BlockSpec((COUT, 1),    lambda i: (0, 0)),  # bn2 bias
            ],
            out_specs=pl.BlockSpec((COUT, M), lambda i: (0, 0)),
        ),
        compiler_params=pltpu.CompilerParams(
            dimension_semantics=("arbitrary",)),              # single block, one TC
    )(x_t, w1b, w2t, b2)


# ------------------------- glue (plain JAX) -------------------------
@jax.jit
def fused_mbconv_forward(x_nchw, params):
    (w1_oihw, g1, be1, m1, v1, w2_oihw, g2, be2, m2, v2) = params

    # Fold BN (inference / running stats) into weights (scale) + bias.
    s1 = g1 / jnp.sqrt(v1 + EPS)
    b1 = (be1 - m1 * s1).reshape(CEXP, 1)
    s2 = g2 / jnp.sqrt(v2 + EPS)
    b2 = (be2 - m2 * s2).reshape(COUT, 1)

    w1f = w1_oihw * s1[:, None, None, None]                    # (CEXP,CIN,3,3)
    # Column order (kh, kw, cin) matches the kernel's per-tap ordering; last
    # column is the folded BN1 bias (contracted against the in-kernel ones row).
    w1t = jnp.transpose(w1f, (0, 2, 3, 1)).reshape(CEXP, K1)
    w1b = jnp.concatenate([w1t, b1], axis=1)                   # (CEXP, K1B)
    w2t = w2_oihw[:, :, 0, 0] * s2[:, None]                    # (COUT, CEXP)

    # Channels-on-sublanes, M on lanes (no halo pad needed anymore).
    x_t = jnp.transpose(x_nchw, (1, 0, 2, 3)).reshape(CIN, M)  # (CIN, M)

    out_t = fused_mbconv_pallas(x_t, w1b, w2t, b2)             # (COUT, M)
    out = out_t.reshape(COUT, N, H, W)
    # TODO(synk): if the consumer is another fused block, keep the (C, N*H*W)
    # layout end-to-end and skip this NCHW transpose (and the input one above).
    return jnp.transpose(out, (1, 0, 2, 3))                    # NCHW


# ------------------------- reference (pure JAX) -------------------------
def reference_forward(x_nchw, params):
    (w1_oihw, g1, be1, m1, v1, w2_oihw, g2, be2, m2, v2) = params

    def bn(y, g, b, mu, var):
        g = g.reshape(1, -1, 1, 1); b = b.reshape(1, -1, 1, 1)
        mu = mu.reshape(1, -1, 1, 1); var = var.reshape(1, -1, 1, 1)
        return (y - mu) / jnp.sqrt(var + EPS) * g + b

    dn = ('NCHW', 'OIHW', 'NCHW')
    y = lax.conv_general_dilated(x_nchw, w1_oihw, (1, 1), 'SAME',
                                 dimension_numbers=dn)
    y = bn(y, g1, be1, m1, v1)
    y = y * jax.nn.sigmoid(y)
    z = lax.conv_general_dilated(y, w2_oihw, (1, 1), 'SAME',
                                 dimension_numbers=dn)
    z = bn(z, g2, be2, m2, v2)
    return z + x_nchw


# ------------------------- main -------------------------
if __name__ == "__main__":
    key = jax.random.PRNGKey(0)
    keys = jax.random.split(key, 8)

    x = jax.random.normal(keys[0], (N, CIN, H, W), jnp.float32)

    w1 = 0.1 * jax.random.normal(keys[1], (CEXP, CIN, KSIZE, KSIZE), jnp.float32)
    g1 = 1.0 + 0.05 * jax.random.normal(keys[2], (CEXP,), jnp.float32)
    be1 = 0.05 * jax.random.normal(keys[3], (CEXP,), jnp.float32)
    m1 = 0.05 * jax.random.normal(keys[4], (CEXP,), jnp.float32)
    v1 = jnp.abs(0.5 + 0.1 * jax.random.normal(keys[5], (CEXP,), jnp.float32))

    w2 = 0.1 * jax.random.normal(keys[6], (COUT, CEXP, 1, 1), jnp.float32)
    g2 = jnp.ones((COUT,), jnp.float32)
    be2 = jnp.zeros((COUT,), jnp.float32)
    m2 = 0.02 * jnp.arange(COUT, dtype=jnp.float32)
    v2 = jnp.ones((COUT,), jnp.float32)

    params = (w1, g1, be1, m1, v1, w2, g2, be2, m2, v2)

    out = jax.block_until_ready(fused_mbconv_forward(x, params))

    ref = jax.block_until_ready(reference_forward(x, params))
    np.testing.assert_allclose(np.asarray(out), np.asarray(ref),
                               rtol=1e-4, atol=1e-4)
    print("KERNEL_OK")
</pallas_src>

<mosaic_0001>
module attributes {stable_mosaic.version = 11 : i64} {
  func.func @fused_mbconv_kernel(%arg0: i32, %arg1: memref<4x512xf32, #tpu.memory_space<vmem>>, %arg2: memref<16x37xf32, #tpu.memory_space<vmem>>, %arg3: memref<4x16xf32, #tpu.memory_space<vmem>>, %arg4: memref<4x1xf32, #tpu.memory_space<vmem>>, %arg5: memref<4x512xf32, #tpu.memory_space<vmem>>) attributes {dimension_semantics = [#tpu.dimension_semantics<arbitrary>], iteration_bounds = array<i64: 1>, scalar_prefetch = 0 : i64, scratch_operands = 0 : i64, tpu.core_type = #tpu.core_type<tc>, window_params = [{pipeline_mode = #tpu.pipeline_mode<synchronous>, transform_indices = @transform_0, window_bounds = array<i64: 4, 512>}, {pipeline_mode = #tpu.pipeline_mode<synchronous>, transform_indices = @transform_1, window_bounds = array<i64: 16, 37>}, {pipeline_mode = #tpu.pipeline_mode<synchronous>, transform_indices = @transform_2, window_bounds = array<i64: 4, 16>}, {pipeline_mode = #tpu.pipeline_mode<synchronous>, transform_indices = @transform_3, window_bounds = array<i64: 4, 1>}, {pipeline_mode = #tpu.pipeline_mode<synchronous>, transform_indices = @transform_4, window_bounds = array<i64: 4, 512>}]} {
    %c0 = arith.constant 0 : index
    %c0_0 = arith.constant 0 : index
    %0 = vector.load %arg1[%c0, %c0_0] : memref<4x512xf32, #tpu.memory_space<vmem>>, vector<4x512xf32>
    %1 = tpu.iota {dimensions = array<i32: 1>} : vector<1x512xi32>
    %c15_i32 = arith.constant 15 : i32
    %2 = vector.broadcast %c15_i32 : i32 to vector<1x512xi32>
    %3 = arith.andi %1, %2 : vector<1x512xi32>
    %c4_i32 = arith.constant 4 : i32
    %4 = vector.broadcast %c4_i32 : i32 to vector<1x512xi32>
    %5 = arith.shrsi %1, %4 : vector<1x512xi32>
    %c15_i32_1 = arith.constant 15 : i32
    %6 = vector.broadcast %c15_i32_1 : i32 to vector<1x512xi32>
    %7 = arith.andi %5, %6 : vector<1x512xi32>
    %c17_i32 = arith.constant 17 : i32
    %8 = tpu.dynamic_rotate %0 by %c17_i32 dim 1 : vector<4x512xf32>, i32 -> vector<4x512xf32>
    %c1_i32 = arith.constant 1 : i32
    %9 = vector.broadcast %c1_i32 : i32 to vector<1x512xi32>
    %10 = arith.cmpi sge, %3, %9 : vector<1x512xi32>
    %c1_i32_2 = arith.constant 1 : i32
    %11 = vector.broadcast %c1_i32_2 : i32 to vector<1x512xi32>
    %12 = arith.cmpi sge, %7, %11 : vector<1x512xi32>
    %13 = arith.andi %10, %12 : vector<1x512xi1>
    %cst = arith.constant 0.000000e+00 : f32
    %14 = vector.shape_cast %13 : vector<1x512xi1> to vector<1x512xi1>
    %15 = vector.broadcast %14 : vector<1x512xi1> to vector<4x512xi1>
    %16 = vector.broadcast %cst : f32 to vector<4x512xf32>
    %17 = arith.select %15, %8, %16 : vector<4x512xi1>, vector<4x512xf32>
    %c16_i32 = arith.constant 16 : i32
    %18 = tpu.dynamic_rotate %0 by %c16_i32 dim 1 : vector<4x512xf32>, i32 -> vector<4x512xf32>
    %c1_i32_3 = arith.constant 1 : i32
    %19 = vector.broadcast %c1_i32_3 : i32 to vector<1x512xi32>
    %20 = arith.cmpi sge, %7, %19 : vector<1x512xi32>
    %cst_4 = arith.constant 0.000000e+00 : f32
    %21 = vector.shape_cast %20 : vector<1x512xi1> to vector<1x512xi1>
    %22 = vector.broadcast %21 : vector<1x512xi1> to vector<4x512xi1>
    %23 = vector.broadcast %cst_4 : f32 to vector<4x512xf32>
    %24 = arith.select %22, %18, %23 : vector<4x512xi1>, vector<4x512xf32>
    %c15_i32_5 = arith.constant 15 : i32
    %25 = tpu.dynamic_rotate %0 by %c15_i32_5 dim 1 : vector<4x512xf32>, i32 -> vector<4x512xf32>
    %c14_i32 = arith.constant 14 : i32
    %26 = vector.broadcast %c14_i32 : i32 to vector<1x512xi32>
    %27 = arith.cmpi sle, %3, %26 : vector<1x512xi32>
    %c1_i32_6 = arith.constant 1 : i32
    %28 = vector.broadcast %c1_i32_6 : i32 to vector<1x512xi32>
    %29 = arith.cmpi sge, %7, %28 : vector<1x512xi32>
    %30 = arith.andi %27, %29 : vector<1x512xi1>
    %cst_7 = arith.constant 0.000000e+00 : f32
    %31 = vector.shape_cast %30 : vector<1x512xi1> to vector<1x512xi1>
    %32 = vector.broadcast %31 : vector<1x512xi1> to vector<4x512xi1>
    %33 = vector.broadcast %cst_7 : f32 to vector<4x512xf32>
    %34 = arith.select %32, %25, %33 : vector<4x512xi1>, vector<4x512xf32>
    %c1_i32_8 = arith.constant 1 : i32
    %35 = tpu.dynamic_rotate %0 by %c1_i32_8 dim 1 : vector<4x512xf32>, i32 -> vector<4x512xf32>
    %c1_i32_9 = arith.constant 1 : i32
    %36 = vector.broadcast %c1_i32_9 : i32 to vector<1x512xi32>
    %37 = arith.cmpi sge, %3, %36 : vector<1x512xi32>
    %cst_10 = arith.constant 0.000000e+00 : f32
    %38 = vector.shape_cast %37 : vector<1x512xi1> to vector<1x512xi1>
    %39 = vector.broadcast %38 : vector<1x512xi1> to vector<4x512xi1>
    %40 = vector.broadcast %cst_10 : f32 to vector<4x512xf32>
    %41 = arith.select %39, %35, %40 : vector<4x512xi1>, vector<4x512xf32>
    %c511_i32 = arith.constant 511 : i32
    %42 = tpu.dynamic_rotate %0 by %c511_i32 dim 1 : vector<4x512xf32>, i32 -> vector<4x512xf32>
    %c14_i32_11 = arith.constant 14 : i32
    %43 = vector.broadcast %c14_i32_11 : i32 to vector<1x512xi32>
    %44 = arith.cmpi sle, %3, %43 : vector<1x512xi32>
    %cst_12 = arith.constant 0.000000e+00 : f32
    %45 = vector.shape_cast %44 : vector<1x512xi1> to vector<1x512xi1>
    %46 = vector.broadcast %45 : vector<1x512xi1> to vector<4x512xi1>
    %47 = vector.broadcast %cst_12 : f32 to vector<4x512xf32>
    %48 = arith.select %46, %42, %47 : vector<4x512xi1>, vector<4x512xf32>
    %c497_i32 = arith.constant 497 : i32
    %49 = tpu.dynamic_rotate %0 by %c497_i32 dim 1 : vector<4x512xf32>, i32 -> vector<4x512xf32>
    %c1_i32_13 = arith.constant 1 : i32
    %50 = vector.broadcast %c1_i32_13 : i32 to vector<1x512xi32>
    %51 = arith.cmpi sge, %3, %50 : vector<1x512xi32>
    %c14_i32_14 = arith.constant 14 : i32
    %52 = vector.broadcast %c14_i32_14 : i32 to vector<1x512xi32>
    %53 = arith.cmpi sle, %7, %52 : vector<1x512xi32>
    %54 = arith.andi %51, %53 : vector<1x512xi1>
    %cst_15 = arith.constant 0.000000e+00 : f32
    %55 = vector.shape_cast %54 : vector<1x512xi1> to vector<1x512xi1>
    %56 = vector.broadcast %55 : vector<1x512xi1> to vector<4x512xi1>
    %57 = vector.broadcast %cst_15 : f32 to vector<4x512xf32>
    %58 = arith.select %56, %49, %57 : vector<4x512xi1>, vector<4x512xf32>
    %c496_i32 = arith.constant 496 : i32
    %59 = tpu.dynamic_rotate %0 by %c496_i32 dim 1 : vector<4x512xf32>, i32 -> vector<4x512xf32>
    %c14_i32_16 = arith.constant 14 : i32
    %60 = vector.broadcast %c14_i32_16 : i32 to vector<1x512xi32>
    %61 = arith.cmpi sle, %7, %60 : vector<1x512xi32>
    %cst_17 = arith.constant 0.000000e+00 : f32
    %62 = vector.shape_cast %61 : vector<1x512xi1> to vector<1x512xi1>
    %63 = vector.broadcast %62 : vector<1x512xi1> to vector<4x512xi1>
    %64 = vector.broadcast %cst_17 : f32 to vector<4x512xf32>
    %65 = arith.select %63, %59, %64 : vector<4x512xi1>, vector<4x512xf32>
    %c495_i32 = arith.constant 495 : i32
    %66 = tpu.dynamic_rotate %0 by %c495_i32 dim 1 : vector<4x512xf32>, i32 -> vector<4x512xf32>
    %c14_i32_18 = arith.constant 14 : i32
    %67 = vector.broadcast %c14_i32_18 : i32 to vector<1x512xi32>
    %68 = arith.cmpi sle, %3, %67 : vector<1x512xi32>
    %c14_i32_19 = arith.constant 14 : i32
    %69 = vector.broadcast %c14_i32_19 : i32 to vector<1x512xi32>
    %70 = arith.cmpi sle, %7, %69 : vector<1x512xi32>
    %71 = arith.andi %68, %70 : vector<1x512xi1>
    %cst_20 = arith.constant 0.000000e+00 : f32
    %72 = vector.shape_cast %71 : vector<1x512xi1> to vector<1x512xi1>
    %73 = vector.broadcast %72 : vector<1x512xi1> to vector<4x512xi1>
    %74 = vector.broadcast %cst_20 : f32 to vector<4x512xf32>
    %75 = arith.select %73, %66, %74 : vector<4x512xi1>, vector<4x512xf32>
    %cst_21 = arith.constant 1.000000e+00 : f32
    %76 = vector.broadcast %cst_21 : f32 to vector<1x512xf32>
    %77 = tpu.concatenate %17, %24, %34, %41, %0, %48, %58, %65, %75, %76 in 0 : vector<4x512xf32>, vector<4x512xf32>, vector<4x512xf32>, vector<4x512xf32>, vector<4x512xf32>, vector<4x512xf32>, vector<4x512xf32>, vector<4x512xf32>, vector<4x512xf32>, vector<1x512xf32> -> vector<37x512xf32>
    %c0_22 = arith.constant 0 : index
    %c0_23 = arith.constant 0 : index
    %78 = vector.load %arg2[%c0_22, %c0_23] : memref<16x37xf32, #tpu.memory_space<vmem>>, vector<16x37xf32>
    %cst_24 = arith.constant dense<0.000000e+00> : vector<16x512xf32>
    %79 = tpu.matmul %78, %77, %cst_24 {dimension_numbers = #tpu.dot_dimension_numbers<[1], [0], [0], [1], [0, 0, 1, 1], [], []>} : vector<16x37xf32>, vector<37x512xf32>, vector<16x512xf32> -> vector<16x512xf32>
    %80 = arith.negf %79 : vector<16x512xf32>
    %81 = math.exp %80 : vector<16x512xf32>
    %cst_25 = arith.constant 1.000000e+00 : f32
    %82 = vector.broadcast %cst_25 : f32 to vector<16x512xf32>
    %83 = arith.addf %82, %81 : vector<16x512xf32>
    %84 = arith.divf %82, %83 : vector<16x512xf32>
    %85 = arith.mulf %79, %84 : vector<16x512xf32>
    %c0_26 = arith.constant 0 : index
    %c0_27 = arith.constant 0 : index
    %86 = vector.load %arg3[%c0_26, %c0_27] : memref<4x16xf32, #tpu.memory_space<vmem>>, vector<4x16xf32>
    %cst_28 = arith.constant dense<0.000000e+00> : vector<4x512xf32>
    %87 = tpu.matmul %86, %85, %cst_28 {dimension_numbers = #tpu.dot_dimension_numbers<[1], [0], [0], [1], [0, 0, 1, 1], [], []>} : vector<4x16xf32>, vector<16x512xf32>, vector<4x512xf32> -> vector<4x512xf32>
    %c0_29 = arith.constant 0 : index
    %c0_30 = arith.constant 0 : index
    %88 = vector.load %arg4[%c0_29, %c0_30] : memref<4x1xf32, #tpu.memory_space<vmem>>, vector<4x1xf32>
    %89 = vector.broadcast %88 : vector<4x1xf32> to vector<4x512xf32>
    %90 = arith.addf %87, %89 : vector<4x512xf32>
    %91 = arith.addf %90, %0 : vector<4x512xf32>
    %c0_31 = arith.constant 0 : index
    %c0_32 = arith.constant 0 : index
    %92 = vector.load %arg5[%c0_31, %c0_32] : memref<4x512xf32, #tpu.memory_space<vmem>>, vector<4x512xf32>
    tpu.vector_store %arg5[%c0_31, %c0_32], %91 {strides = array<i32>} : memref<4x512xf32, #tpu.memory_space<vmem>>, vector<4x512xf32>,
    return
  }
  func.func @transform_0(%arg0: i32) -> (i32, i32) {
    %c0_i32 = arith.constant 0 : i32
    %c0_i32_0 = arith.constant 0 : i32
    %c0_i32_1 = arith.constant 0 : i32
    return %c0_i32, %c0_i32_0 : i32, i32
  }
  func.func @transform_1(%arg0: i32) -> (i32, i32) {
    %c0_i32 = arith.constant 0 : i32
    %c0_i32_0 = arith.constant 0 : i32
    %c0_i32_1 = arith.constant 0 : i32
    return %c0_i32, %c0_i32_0 : i32, i32
  }
  func.func @transform_2(%arg0: i32) -> (i32, i32) {
    %c0_i32 = arith.constant 0 : i32
    %c0_i32_0 = arith.constant 0 : i32
    %c0_i32_1 = arith.constant 0 : i32
    return %c0_i32, %c0_i32_0 : i32, i32
  }
  func.func @transform_3(%arg0: i32) -> (i32, i32) {
    %c0_i32 = arith.constant 0 : i32
    %c0_i32_0 = arith.constant 0 : i32
    %c0_i32_1 = arith.constant 0 : i32
    return %c0_i32, %c0_i32_0 : i32, i32
  }
  func.func @transform_4(%arg0: i32) -> (i32, i32) {
    %c0_i32 = arith.constant 0 : i32
    %c0_i32_0 = arith.constant 0 : i32
    %c0_i32_1 = arith.constant 0 : i32
    return %c0_i32, %c0_i32_0 : i32, i32
  }
}

</mosaic_0001>

<llo_original>
// kernel: fused_mbconv_forward.1
$region0: #{fused_mbconv_forward.1}
  #allocation0 [shape = 'u32[]', space=smem, size = 0x4, offset = 0x4, fixed_abs, tag = 'smem constant byte address 0x4 - core index']
  #allocation1 [shape = 'u32[72,128]{1,0:T(1,128)}', space=vmem, size = 0x9000, scoped, tag = 'internal scratch']
  %s0 = inlined_call_operand.vmem [shape: f32[4,512], index: 0, kind: input, shape index: {}]
  %s1 = inlined_call_operand.vmem [shape: f32[16,37], index: 1, kind: input, shape index: {}]
  %s2 = inlined_call_operand.vmem [shape: f32[4,16], index: 2, kind: input, shape index: {}]
  %s3 = inlined_call_operand.vmem [shape: f32[4,1], index: 3, kind: input, shape index: {}]
  %s4 = inlined_call_operand.vmem [shape: f32[4,512], index: 4, kind: output, shape index: {}]
  %s5 = sld [smem:[#allocation0]]
  $region26: #{fused_mbconv_forward.1} parent=0
    _
  %s7 = ssub.s32 1, %s5
  %s8 = scalar_select 0, %s7, %s5
  // Predicated region
  $region2: #{fused_mbconv_forward.1} parent=0 // pred_check
    _
  $region3: #{fused_mbconv_forward.1} parent=0 // pred_check_branch
    %10 = sbr.rel (0) target = $region5
  $region4: #{fused_mbconv_forward.1} parent=0 // pred_region
    _
  $region5: #{fused_mbconv_forward.1} parent=0 // pred_fallthru
    _
  // Predicated region
  $region6: #{fused_mbconv_forward.1} parent=0 // pred_check
    _
  $region7: #{fused_mbconv_forward.1} parent=0 // pred_check_branch
    %12 = sbr.rel (0) target = $region9
  $region8: #{fused_mbconv_forward.1} parent=0 // pred_region
    _
  $region9: #{fused_mbconv_forward.1} parent=0 // pred_fallthru
    _
  // Predicated region
  $region10: #{fused_mbconv_forward.1} parent=0 // pred_check
    _
  $region11: #{fused_mbconv_forward.1} parent=0 // pred_check_branch
    %14 = sbr.rel (0) target = $region13
  $region12: #{fused_mbconv_forward.1} parent=0 // pred_region
    _
  $region13: #{fused_mbconv_forward.1} parent=0 // pred_fallthru
    _
  // Predicated region
  $region14: #{fused_mbconv_forward.1} parent=0 // pred_check
    _
  $region15: #{fused_mbconv_forward.1} parent=0 // pred_check_branch
    %16 = sbr.rel (0) target = $region17
  $region16: #{fused_mbconv_forward.1} parent=0 // pred_region
    _
  $region17: #{fused_mbconv_forward.1} parent=0 // pred_fallthru
    _
  %v17 = vld [vmem:[%s0] sm:$0xff]
  %v18 = vld [vmem:[%s0 + $0x8] sm:$0xff]
  %v19 = vlaneseq
  %v20 = vand.u32 %v19, 127
  %v21 = vadd.s32 %v20, 128
  %v22 = vadd.s32 %v20, 256
  %v23 = vadd.s32 %v20, 384
  %v24 = vand.u32 %v20, 15
  %v25 = vand.u32 %v21, 15
  %v26 = vand.u32 %v22, 15
  %v27 = vand.u32 %v23, 15
  %v28 = vshra.s32 %v20, 4
  %v29 = vshra.s32 %v21, 4
  %v30 = vshra.s32 %v22, 4
  %v31 = vshra.s32 %v23, 4
  %v32 = vand.u32 %v28, 15
  %v33 = vand.u32 %v29, 15
  %v34 = vand.u32 %v30, 15
  %v35 = vand.u32 %v31, 15
  %38 = vst [vmem:[#allocation1] ss:$2 sm:$0xff] %v17
  %s39 = scalar_lea.vmem [#allocation1], 16
  %40 = vst [vmem:[%s39] ss:$2 sm:$0xff] %v18
  %v41 = vld.sshfl [vmem:[#allocation1] sm:$0xff pattern:$0x75316420]
  %v42 = vld.sshfl [vmem:[#allocation1 + $0x8] sm:$0xff pattern:$0x75316420]
  %v43 = vld.sshfl [vmem:[#allocation1 + $0x10] sm:$0xff pattern:$0x75316420]
  %v44 = vld.sshfl [vmem:[#allocation1 + $0x18] sm:$0xff pattern:$0x75316420]
  %49 = vrot.lane.b32.xlu0 %v41, 17
  %v50 = vpop.permute.xlu0 %49
  %51 = vrot.lane.b32.xlu0 %v42, 17
  %v52 = vpop.permute.xlu0 %51
  %53 = vrot.lane.b32.xlu0 %v43, 17
  %v54 = vpop.permute.xlu0 %53
  %55 = vrot.lane.b32.xlu0 %v44, 17
  %v56 = vpop.permute.xlu0 %55
  %vm57 = vcmp.lt.s32.totalorder %v20, 17
  %v58 = vsel %vm57, %v54, %v56
  %v59 = vsel %vm57, %v52, %v54
  %v60 = vsel %vm57, %v50, %v52
  %v61 = vsel %vm57, %v56, %v50
  %vm62 = vcmp.ge.s32.totalorder %v24, 1
  %vm63 = vcmp.ge.s32.totalorder %v25, 1
  %vm64 = vcmp.ge.s32.totalorder %v26, 1
  %vm65 = vcmp.ge.s32.totalorder %v27, 1
  %vm66 = vcmp.ge.s32.totalorder %v32, 1
  %vm67 = vcmp.ge.s32.totalorder %v33, 1
  %vm68 = vcmp.ge.s32.totalorder %v34, 1
  %vm69 = vcmp.ge.s32.totalorder %v35, 1
  %vm70 = vmand %vm62, %vm66
  %vm71 = vmand %vm63, %vm67
  %vm72 = vmand %vm64, %vm68
  %vm73 = vmand %vm65, %vm69
  %v74 = vsel %vm70, 1, 0
  %v75 = vsel %vm71, 1, 0
  %v76 = vsel %vm72, 1, 0
  %v77 = vsel %vm73, 1, 0
  %vm78 = vcmp.eq.s32.totalorder %v74, 1
  %vm79 = vcmp.eq.s32.totalorder %v75, 1
  %vm80 = vcmp.eq.s32.totalorder %v76, 1
  %vm81 = vcmp.eq.s32.totalorder %v77, 1
  %v82 = vsel %vm78, %v61, 0.0
  %v83 = vsel %vm79, %v60, 0.0
  %v84 = vsel %vm80, %v59, 0.0
  %v85 = vsel %vm81, %v58, 0.0
  %86 = vst [vmem:[#allocation1] ss:$2 sm:$0xff] %v17
  %s87 = scalar_lea.vmem [#allocation1], 16
  %88 = vst [vmem:[%s87] ss:$2 sm:$0xff] %v18
  %v89 = vld.sshfl [vmem:[#allocation1] sm:$0xff pattern:$0x75316420]
  %v90 = vld.sshfl [vmem:[#allocation1 + $0x8] sm:$0xff pattern:$0x75316420]
  %v91 = vld.sshfl [vmem:[#allocation1 + $0x10] sm:$0xff pattern:$0x75316420]
  %v92 = vld.sshfl [vmem:[#allocation1 + $0x18] sm:$0xff pattern:$0x75316420]
  %97 = vrot.lane.b32.xlu0 %v89, 16
  %v98 = vpop.permute.xlu0 %97
  %99 = vrot.lane.b32.xlu0 %v90, 16
  %v100 = vpop.permute.xlu0 %99
  %101 = vrot.lane.b32.xlu0 %v91, 16
  %v102 = vpop.permute.xlu0 %101
  %103 = vrot.lane.b32.xlu0 %v92, 16
  %v104 = vpop.permute.xlu0 %103
  %vm105 = vcmp.lt.s32.totalorder %v20, 16
  %v106 = vsel %vm105, %v102, %v104
  %v107 = vsel %vm105, %v100, %v102
  %v108 = vsel %vm105, %v98, %v100
  %v109 = vsel %vm105, %v104, %v98
  %v110 = vsel %vm66, 1, 0
  %v111 = vsel %vm67, 1, 0
  %v112 = vsel %vm68, 1, 0
  %v113 = vsel %vm69, 1, 0
  %vm114 = vcmp.eq.s32.totalorder %v110, 1
  %vm115 = vcmp.eq.s32.totalorder %v111, 1
  %vm116 = vcmp.eq.s32.totalorder %v112, 1
  %vm117 = vcmp.eq.s32.totalorder %v113, 1
  %v118 = vsel %vm114, %v109, 0.0
  %v119 = vsel %vm115, %v108, 0.0
  %v120 = vsel %vm116, %v107, 0.0
  %v121 = vsel %vm117, %v106, 0.0
  %122 = vst [vmem:[#allocation1] ss:$2 sm:$0xff] %v17
  %s123 = scalar_lea.vmem [#allocation1], 16
  %124 = vst [vmem:[%s123] ss:$2 sm:$0xff] %v18
  %v125 = vld.sshfl [vmem:[#allocation1] sm:$0xff pattern:$0x75316420]
  %v126 = vld.sshfl [vmem:[#allocation1 + $0x8] sm:$0xff pattern:$0x75316420]
  %v127 = vld.sshfl [vmem:[#allocation1 + $0x10] sm:$0xff pattern:$0x75316420]
  %v128 = vld.sshfl [vmem:[#allocation1 + $0x18] sm:$0xff pattern:$0x75316420]
  %133 = vrot.lane.b32.xlu0 %v125, 15
  %v134 = vpop.permute.xlu0 %133
  %135 = vrot.lane.b32.xlu0 %v126, 15
  %v136 = vpop.permute.xlu0 %135
  %137 = vrot.lane.b32.xlu0 %v127, 15
  %v138 = vpop.permute.xlu0 %137
  %139 = vrot.lane.b32.xlu0 %v128, 15
  %v140 = vpop.permute.xlu0 %139
  %vm141 = vcmp.lt.s32.totalorder %v20, 15
  %v142 = vsel %vm141, %v138, %v140
  %v143 = vsel %vm141, %v136, %v138
  %v144 = vsel %vm141, %v134, %v136
  %v145 = vsel %vm141, %v140, %v134
  %vm146 = vcmp.le.s32.totalorder %v24, 14
  %vm147 = vcmp.le.s32.totalorder %v25, 14
  %vm148 = vcmp.le.s32.totalorder %v26, 14
  %vm149 = vcmp.le.s32.totalorder %v27, 14
  %vm150 = vmand %vm146, %vm66
  %vm151 = vmand %vm147, %vm67
  %vm152 = vmand %vm148, %vm68
  %vm153 = vmand %vm149, %vm69
  %v154 = vsel %vm150, 1, 0
  %v155 = vsel %vm151, 1, 0
  %v156 = vsel %vm152, 1, 0
  %v157 = vsel %vm153, 1, 0
  %vm158 = vcmp.eq.s32.totalorder %v154, 1
  %vm159 = vcmp.eq.s32.totalorder %v155, 1
  %vm160 = vcmp.eq.s32.totalorder %v156, 1
  %vm161 = vcmp.eq.s32.totalorder %v157, 1
  %v162 = vsel %vm158, %v145, 0.0
  %v163 = vsel %vm159, %v144, 0.0
  %v164 = vsel %vm160, %v143, 0.0
  %v165 = vsel %vm161, %v142, 0.0
  %166 = vst [vmem:[#allocation1] ss:$2 sm:$0xff] %v17
  %s167 = scalar_lea.vmem [#allocation1], 16
  %168 = vst [vmem:[%s167] ss:$2 sm:$0xff] %v18
  %v169 = vld.sshfl [vmem:[#allocation1] sm:$0xff pattern:$0x75316420]
  %v170 = vld.sshfl [vmem:[#allocation1 + $0x8] sm:$0xff pattern:$0x75316420]
  %v171 = vld.sshfl [vmem:[#allocation1 + $0x10] sm:$0xff pattern:$0x75316420]
  %v172 = vld.sshfl [vmem:[#allocation1 + $0x18] sm:$0xff pattern:$0x75316420]
  %177 = vrot.lane.b32.xlu0 %v169, 1
  %v178 = vpop.permute.xlu0 %177
  %179 = vrot.lane.b32.xlu0 %v170, 1
  %v180 = vpop.permute.xlu0 %179
  %181 = vrot.lane.b32.xlu0 %v171, 1
  %v182 = vpop.permute.xlu0 %181
  %183 = vrot.lane.b32.xlu0 %v172, 1
  %v184 = vpop.permute.xlu0 %183
  %vm185 = vcmp.lt.s32.totalorder %v20, 1
  %v186 = vsel %vm185, %v182, %v184
  %v187 = vsel %vm185, %v180, %v182
  %v188 = vsel %vm185, %v178, %v180
  %v189 = vsel %vm185, %v184, %v178
  %v190 = vsel %vm62, 1, 0
  %v191 = vsel %vm63, 1, 0
  %v192 = vsel %vm64, 1, 0
  %v193 = vsel %vm65, 1, 0
  %vm194 = vcmp.eq.s32.totalorder %v190, 1
  %vm195 = vcmp.eq.s32.totalorder %v191, 1
  %vm196 = vcmp.eq.s32.totalorder %v192, 1
  %vm197 = vcmp.eq.s32.totalorder %v193, 1
  %v198 = vsel %vm194, %v189, 0.0
  %v199 = vsel %vm195, %v188, 0.0
  %v200 = vsel %vm196, %v187, 0.0
  %v201 = vsel %vm197, %v186, 0.0
  %202 = vst [vmem:[#allocation1] ss:$2 sm:$0xff] %v17
  %s203 = scalar_lea.vmem [#allocation1], 16
  %204 = vst [vmem:[%s203] ss:$2 sm:$0xff] %v18
  %v205 = vld.sshfl [vmem:[#allocation1] sm:$0xff pattern:$0x75316420]
  %v206 = vld.sshfl [vmem:[#allocation1 + $0x8] sm:$0xff pattern:$0x75316420]
  %v207 = vld.sshfl [vmem:[#allocation1 + $0x10] sm:$0xff pattern:$0x75316420]
  %v208 = vld.sshfl [vmem:[#allocation1 + $0x18] sm:$0xff pattern:$0x75316420]
  %213 = vrot.lane.b32.xlu0 %v205, 127
  %v214 = vpop.permute.xlu0 %213
  %215 = vrot.lane.b32.xlu0 %v206, 127
  %v216 = vpop.permute.xlu0 %215
  %217 = vrot.lane.b32.xlu0 %v207, 127
  %v218 = vpop.permute.xlu0 %217
  %219 = vrot.lane.b32.xlu0 %v208, 127
  %v220 = vpop.permute.xlu0 %219
  %vm221 = vcmp.lt.s32.totalorder %v20, 127
  %v222 = vsel %vm221, %v218, %v220
  %v223 = vsel %vm221, %v216, %v218
  %v224 = vsel %vm221, %v214, %v216
  %v225 = vsel %vm221, %v220, %v214
  %v226 = vsel %vm146, 1, 0
  %v227 = vsel %vm147, 1, 0
  %v228 = vsel %vm148, 1, 0
  %v229 = vsel %vm149, 1, 0
  %vm230 = vcmp.eq.s32.totalorder %v226, 1
  %vm231 = vcmp.eq.s32.totalorder %v227, 1
  %vm232 = vcmp.eq.s32.totalorder %v228, 1
  %vm233 = vcmp.eq.s32.totalorder %v229, 1
  %v234 = vsel %vm230, %v224, 0.0
  %v235 = vsel %vm231, %v223, 0.0
  %v236 = vsel %vm232, %v222, 0.0
  %v237 = vsel %vm233, %v225, 0.0
  %238 = vst [vmem:[#allocation1] ss:$2 sm:$0xff] %v17
  %s239 = scalar_lea.vmem [#allocation1], 16
  %240 = vst [vmem:[%s239] ss:$2 sm:$0xff] %v18
  %v241 = vld.sshfl [vmem:[#allocation1] sm:$0xff pattern:$0x75316420]
  %v242 = vld.sshfl [vmem:[#allocation1 + $0x8] sm:$0xff pattern:$0x75316420]
  %v243 = vld.sshfl [vmem:[#allocation1 + $0x10] sm:$0xff pattern:$0x75316420]
  %v244 = vld.sshfl [vmem:[#allocation1 + $0x18] sm:$0xff pattern:$0x75316420]
  %249 = vrot.lane.b32.xlu0 %v241, 113
  %v250 = vpop.permute.xlu0 %249
  %251 = vrot.lane.b32.xlu0 %v242, 113
  %v252 = vpop.permute.xlu0 %251
  %253 = vrot.lane.b32.xlu0 %v243, 113
  %v254 = vpop.permute.xlu0 %253
  %255 = vrot.lane.b32.xlu0 %v244, 113
  %v256 = vpop.permute.xlu0 %255
  %vm257 = vcmp.lt.s32.totalorder %v20, 113
  %v258 = vsel %vm257, %v254, %v256
  %v259 = vsel %vm257, %v252, %v254
  %v260 = vsel %vm257, %v250, %v252
  %v261 = vsel %vm257, %v256, %v250
  %vm262 = vcmp.le.s32.totalorder %v32, 14
  %vm263 = vcmp.le.s32.totalorder %v33, 14
  %vm264 = vcmp.le.s32.totalorder %v34, 14
  %vm265 = vcmp.le.s32.totalorder %v35, 14
  %vm266 = vmand %vm62, %vm262
  %vm267 = vmand %vm63, %vm263
  %vm268 = vmand %vm64, %vm264
  %vm269 = vmand %vm65, %vm265
  %v270 = vsel %vm266, 1, 0
  %v271 = vsel %vm267, 1, 0
  %v272 = vsel %vm268, 1, 0
  %v273 = vsel %vm269, 1, 0
  %vm274 = vcmp.eq.s32.totalorder %v270, 1
  %vm275 = vcmp.eq.s32.totalorder %v271, 1
  %vm276 = vcmp.eq.s32.totalorder %v272, 1
  %vm277 = vcmp.eq.s32.totalorder %v273, 1
  %v278 = vsel %vm274, %v260, 0.0
  %v279 = vsel %vm275, %v259, 0.0
  %v280 = vsel %vm276, %v258, 0.0
  %v281 = vsel %vm277, %v261, 0.0
  %282 = vst [vmem:[#allocation1] ss:$2 sm:$0xff] %v17
  %s283 = scalar_lea.vmem [#allocation1], 16
  %284 = vst [vmem:[%s283] ss:$2 sm:$0xff] %v18
  %v285 = vld.sshfl [vmem:[#allocation1] sm:$0xff pattern:$0x75316420]
  %v286 = vld.sshfl [vmem:[#allocation1 + $0x8] sm:$0xff pattern:$0x75316420]
  %v287 = vld.sshfl [vmem:[#allocation1 + $0x10] sm:$0xff pattern:$0x75316420]
  %v288 = vld.sshfl [vmem:[#allocation1 + $0x18] sm:$0xff pattern:$0x75316420]
  %293 = vrot.lane.b32.xlu0 %v285, 112
  %v294 = vpop.permute.xlu0 %293
  %295 = vrot.lane.b32.xlu0 %v286, 112
  %v296 = vpop.permute.xlu0 %295
  %297 = vrot.lane.b32.xlu0 %v287, 112
  %v298 = vpop.permute.xlu0 %297
  %299 = vrot.lane.b32.xlu0 %v288, 112
  %v300 = vpop.permute.xlu0 %299
  %vm301 = vcmp.lt.s32.totalorder %v20, 112
  %v302 = vsel %vm301, %v298, %v300
  %v303 = vsel %vm301, %v296, %v298
  %v304 = vsel %vm301, %v294, %v296
  %v305 = vsel %vm301, %v300, %v294
  %v306 = vsel %vm262, 1, 0
  %v307 = vsel %vm263, 1, 0
  %v308 = vsel %vm264, 1, 0
  %v309 = vsel %vm265, 1, 0
  %vm310 = vcmp.eq.s32.totalorder %v306, 1
  %vm311 = vcmp.eq.s32.totalorder %v307, 1
  %vm312 = vcmp.eq.s32.totalorder %v308, 1
  %vm313 = vcmp.eq.s32.totalorder %v309, 1
  %v314 = vsel %vm310, %v304, 0.0
  %v315 = vsel %vm311, %v303, 0.0
  %v316 = vsel %vm312, %v302, 0.0
  %v317 = vsel %vm313, %v305, 0.0
  %318 = vst [vmem:[#allocation1] ss:$2 sm:$0xff] %v17
  %s319 = scalar_lea.vmem [#allocation1], 16
  %320 = vst [vmem:[%s319] ss:$2 sm:$0xff] %v18
  %v321 = vld.sshfl [vmem:[#allocation1] sm:$0xff pattern:$0x75316420]
  %v322 = vld.sshfl [vmem:[#allocation1 + $0x8] sm:$0xff pattern:$0x75316420]
  %v323 = vld.sshfl [vmem:[#allocation1 + $0x10] sm:$0xff pattern:$0x75316420]
  %v324 = vld.sshfl [vmem:[#allocation1 + $0x18] sm:$0xff pattern:$0x75316420]
  %329 = vrot.lane.b32.xlu0 %v321, 111
  %v330 = vpop.permute.xlu0 %329
  %331 = vrot.lane.b32.xlu0 %v322, 111
  %v332 = vpop.permute.xlu0 %331
  %333 = vrot.lane.b32.xlu0 %v323, 111
  %v334 = vpop.permute.xlu0 %333
  %335 = vrot.lane.b32.xlu0 %v324, 111
  %v336 = vpop.permute.xlu0 %335
  %vm337 = vcmp.lt.s32.totalorder %v20, 111
  %v338 = vsel %vm337, %v334, %v336
  %v339 = vsel %vm337, %v332, %v334
  %v340 = vsel %vm337, %v330, %v332
  %v341 = vsel %vm337, %v336, %v330
  %vm342 = vmand %vm146, %vm262
  %vm343 = vmand %vm147, %vm263
  %vm344 = vmand %vm148, %vm264
  %vm345 = vmand %vm149, %vm265
  %v346 = vsel %vm342, 1, 0
  %v347 = vsel %vm343, 1, 0
  %v348 = vsel %vm344, 1, 0
  %v349 = vsel %vm345, 1, 0
  %vm350 = vcmp.eq.s32.totalorder %v346, 1
  %vm351 = vcmp.eq.s32.totalorder %v347, 1
  %vm352 = vcmp.eq.s32.totalorder %v348, 1
  %vm353 = vcmp.eq.s32.totalorder %v349, 1
  %v354 = vsel %vm350, %v340, 0.0
  %v355 = vsel %vm351, %v339, 0.0
  %v356 = vsel %vm352, %v338, 0.0
  %v357 = vsel %vm353, %v341, 0.0
  %v362 = vrot.slane %v118, 4
  %v363 = vrot.slane %v119, 4
  %v364 = vrot.slane %v120, 4
  %v365 = vrot.slane %v121, 4
  %v374 = vrot.slane %v198, 4
  %v375 = vrot.slane %v199, 4
  %v376 = vrot.slane %v200, 4
  %v377 = vrot.slane %v201, 4
  %382 = vst [vmem:[#allocation1] ss:$2 sm:$0xff] %v17
  %s383 = scalar_lea.vmem [#allocation1], 16
  %384 = vst [vmem:[%s383] ss:$2 sm:$0xff] %v18
  %v385 = vld.sshfl [vmem:[#allocation1] sm:$0xff pattern:$0x75316420]
  %v386 = vld.sshfl [vmem:[#allocation1 + $0x8] sm:$0xff pattern:$0x75316420]
  %v387 = vld.sshfl [vmem:[#allocation1 + $0x10] sm:$0xff pattern:$0x75316420]
  %v388 = vld.sshfl [vmem:[#allocation1 + $0x18] sm:$0xff pattern:$0x75316420]
  %v397 = vrot.slane %v234, 4
  %v398 = vrot.slane %v235, 4
  %v399 = vrot.slane %v236, 4
  %v400 = vrot.slane %v237, 4
  %v409 = vrot.slane %v314, 4
  %v410 = vrot.slane %v315, 4
  %v411 = vrot.slane %v316, 4
  %v412 = vrot.slane %v317, 4
  %vm417 = vcmask 1043456
  %v418 = vsel %vm417, %v82, %v362
  %v419 = vsel %vm417, %v83, %v363
  %v420 = vsel %vm417, %v84, %v364
  %v421 = vsel %vm417, %v85, %v365
  %v422 = vsel %vm417, %v162, %v374
  %v423 = vsel %vm417, %v163, %v375
  %v424 = vsel %vm417, %v164, %v376
  %v425 = vsel %vm417, %v165, %v377
  %v426 = vsel %vm417, %v385, %v397
  %v427 = vsel %vm417, %v386, %v398
  %v428 = vsel %vm417, %v387, %v399
  %v429 = vsel %vm417, %v388, %v400
  %v430 = vsel %vm417, %v278, %v409
  %v431 = vsel %vm417, %v279, %v410
  %v432 = vsel %vm417, %v280, %v411
  %v433 = vsel %vm417, %v281, %v412
  %v434 = vsel %vm417, %v354, 1.0
  %v435 = vsel %vm417, %v355, 1.0
  %v436 = vsel %vm417, %v356, 1.0
  %v437 = vsel %vm417, %v357, 1.0
  %v438 = vld [vmem:[%s1] sm:$0xff]
  %v439 = vld [vmem:[%s1 + $0x8] sm:$0xff]
  %vm440 = vcmask 302080
  %v442 = vsel %vm440, %v438, 0
  %v445 = vsel %vm440, %v439, 0
  %vm447 = vcmask 1044480
  %v449 = vsel %vm447, %v434, 0
  %v452 = vsel %vm447, %v435, 0
  %v455 = vsel %vm447, %v436, 0
  %v458 = vsel %vm447, %v437, 0
  %460 = vmatpush.msra.mxu0 0.0
  %461 = vmatpush.msra.mxu0 0.0
  %462 = vmatpush.msra.mxu0 0.0
  %463 = vmatpush.msra.mxu0 0.0
  %464 = vmatpush.msra.mxu0 0.0
  %465 = vmatpush.msra.mxu0 0.0
  %466 = vmatpush.msra.mxu0 0.0
  %467 = vmatpush.msra.mxu0 0.0
  %468 = vmatpush.msra.mxu0 0.0
  %469 = vmatpush.msra.mxu0 0.0
  %470 = vmatpush.msra.mxu0 0.0
  %471 = vmatpush.msra.mxu0 %v449
  %472 = vmatpush.msra.mxu0 %v430
  %473 = vmatpush.msra.mxu0 %v426
  %474 = vmatpush.msra.mxu0 %v422
  %475 = vmatpush.msra.mxu0 %v418
  %476 = vmatmul.f32.gmra.mxu0 %v442
  %v477 = vpop.f32.mrf.mxu0
  %v478 = vadd.f32 0.0, %v477
  %479 = vmatmul.f32.gmra.mxu0 %v445
  %v480 = vpop.f32.mrf.mxu0
  %v481 = vadd.f32 0.0, %v480
  %482 = vdwg.mxu0
  %483 = vmatpush.msra.mxu0 0.0
  %484 = vmatpush.msra.mxu0 0.0
  %485 = vmatpush.msra.mxu0 0.0
  %486 = vmatpush.msra.mxu0 0.0
  %487 = vmatpush.msra.mxu0 0.0
  %488 = vmatpush.msra.mxu0 0.0
  %489 = vmatpush.msra.mxu0 0.0
  %490 = vmatpush.msra.mxu0 0.0
  %491 = vmatpush.msra.mxu0 0.0
  %492 = vmatpush.msra.mxu0 0.0
  %493 = vmatpush.msra.mxu0 0.0
  %494 = vmatpush.msra.mxu0 %v452
  %495 = vmatpush.msra.mxu0 %v431
  %496 = vmatpush.msra.mxu0 %v427
  %497 = vmatpush.msra.mxu0 %v423
  %498 = vmatpush.msra.mxu0 %v419
  %499 = vmatmul.f32.gmra.mxu0 %v442
  %v500 = vpop.f32.mrf.mxu0
  %v501 = vadd.f32 0.0, %v500
  %502 = vmatmul.f32.gmra.mxu0 %v445
  %v503 = vpop.f32.mrf.mxu0
  %v504 = vadd.f32 0.0, %v503
  %505 = vdwg.mxu0
  %506 = vmatpush.msra.mxu0 0.0
  %507 = vmatpush.msra.mxu0 0.0
  %508 = vmatpush.msra.mxu0 0.0
  %509 = vmatpush.msra.mxu0 0.0
  %510 = vmatpush.msra.mxu0 0.0
  %511 = vmatpush.msra.mxu0 0.0
  %512 = vmatpush.msra.mxu0 0.0
  %513 = vmatpush.msra.mxu0 0.0
  %514 = vmatpush.msra.mxu0 0.0
  %515 = vmatpush.msra.mxu0 0.0
  %516 = vmatpush.msra.mxu0 0.0
  %517 = vmatpush.msra.mxu0 %v455
  %518 = vmatpush.msra.mxu0 %v432
  %519 = vmatpush.msra.mxu0 %v428
  %520 = vmatpush.msra.mxu0 %v424
  %521 = vmatpush.msra.mxu0 %v420
  %522 = vmatmul.f32.gmra.mxu0 %v442
  %v523 = vpop.f32.mrf.mxu0
  %v524 = vadd.f32 0.0, %v523
  %525 = vmatmul.f32.gmra.mxu0 %v445
  %v526 = vpop.f32.mrf.mxu0
  %v527 = vadd.f32 0.0, %v526
  %528 = vdwg.mxu0
  %529 = vmatpush.msra.mxu0 0.0
  %530 = vmatpush.msra.mxu0 0.0
  %531 = vmatpush.msra.mxu0 0.0
  %532 = vmatpush.msra.mxu0 0.0
  %533 = vmatpush.msra.mxu0 0.0
  %534 = vmatpush.msra.mxu0 0.0
  %535 = vmatpush.msra.mxu0 0.0
  %536 = vmatpush.msra.mxu0 0.0
  %537 = vmatpush.msra.mxu0 0.0
  %538 = vmatpush.msra.mxu0 0.0
  %539 = vmatpush.msra.mxu0 0.0
  %540 = vmatpush.msra.mxu0 %v458
  %541 = vmatpush.msra.mxu0 %v433
  %542 = vmatpush.msra.mxu0 %v429
  %543 = vmatpush.msra.mxu0 %v425
  %544 = vmatpush.msra.mxu0 %v421
  %545 = vmatmul.f32.gmra.mxu0 %v442
  %v546 = vpop.f32.mrf.mxu0
  %v547 = vadd.f32 0.0, %v546
  %548 = vmatmul.f32.gmra.mxu0 %v445
  %v549 = vpop.f32.mrf.mxu0
  %v550 = vadd.f32 0.0, %v549
  %551 = vdwg.mxu0
  %v552 = vxor.u32 %v478, 2147483648
  %v553 = vxor.u32 %v501, 2147483648
  %v554 = vxor.u32 %v524, 2147483648
  %v555 = vxor.u32 %v547, 2147483648
  %v556 = vxor.u32 %v481, 2147483648
  %v557 = vxor.u32 %v504, 2147483648
  %v558 = vxor.u32 %v527, 2147483648
  %v559 = vxor.u32 %v550, 2147483648
  %v560 = vmul.f32 %v552, 1.442695
  %v561 = vpow.pop %v560
  %v562 = vmul.f32 %v553, 1.442695
  %v563 = vpow.pop %v562
  %v564 = vmul.f32 %v554, 1.442695
  %v565 = vpow.pop %v564
  %v566 = vmul.f32 %v555, 1.442695
  %v567 = vpow.pop %v566
  %v568 = vmul.f32 %v556, 1.442695
  %v569 = vpow.pop %v568
  %v570 = vmul.f32 %v557, 1.442695
  %v571 = vpow.pop %v570
  %v572 = vmul.f32 %v558, 1.442695
  %v573 = vpow.pop %v572
  %v574 = vmul.f32 %v559, 1.442695
  %v575 = vpow.pop %v574
  %v576 = vadd.f32 %v561, 1.0
  %v577 = vadd.f32 %v563, 1.0
  %v578 = vadd.f32 %v565, 1.0
  %v579 = vadd.f32 %v567, 1.0
  %v580 = vadd.f32 %v569, 1.0
  %v581 = vadd.f32 %v571, 1.0
  %v582 = vadd.f32 %v573, 1.0
  %v583 = vadd.f32 %v575, 1.0
  %v584 = vrcp.pop %v576
  %v585 = vmul.f32 %v576, %v584
  %v586 = vsub.f32 1.0, %v585
  %v587 = vmul.f32 %v584, %v586
  %v588 = vadd.f32 %v584, %v587
  %vm589 = vweird.f32 %v576
  %vm590 = vweird.f32 %v584
  %vm591 = vmor %vm589, %vm590
  %v592 = vsel %vm591, %v584, %v588
  %v593 = vand.u32 2147483647, %v576
  %vm594 = vcmp.eq.f32.partialorder %v593, 8.507059e+37
  %v595 = vand.u32 %v576, 2147483648
  %v596 = vor.u32 1.1754944e-38, %v595
  %v597 = vsel %vm594, %v596, %v592
  %v598 = vmul.f32 1.0, %v597
  %v599 = vrcp.pop %v577
  %v600 = vmul.f32 %v577, %v599
  %v601 = vsub.f32 1.0, %v600
  %v602 = vmul.f32 %v599, %v601
  %v603 = vadd.f32 %v599, %v602
  %vm604 = vweird.f32 %v577
  %vm605 = vweird.f32 %v599
  %vm606 = vmor %vm604, %vm605
  %v607 = vsel %vm606, %v599, %v603
  %v608 = vand.u32 2147483647, %v577
  %vm609 = vcmp.eq.f32.partialorder %v608, 8.507059e+37
  %v610 = vand.u32 %v577, 2147483648
  %v611 = vor.u32 1.1754944e-38, %v610
  %v612 = vsel %vm609, %v611, %v607
  %v613 = vmul.f32 1.0, %v612
  %v614 = vrcp.pop %v578
  %v615 = vmul.f32 %v578, %v614
  %v616 = vsub.f32 1.0, %v615
  %v617 = vmul.f32 %v614, %v616
  %v618 = vadd.f32 %v614, %v617
  %vm619 = vweird.f32 %v578
  %vm620 = vweird.f32 %v614
  %vm621 = vmor %vm619, %vm620
  %v622 = vsel %vm621, %v614, %v618
  %v623 = vand.u32 2147483647, %v578
  %vm624 = vcmp.eq.f32.partialorder %v623, 8.507059e+37
  %v625 = vand.u32 %v578, 2147483648
  %v626 = vor.u32 1.1754944e-38, %v625
  %v627 = vsel %vm624, %v626, %v622
  %v628 = vmul.f32 1.0, %v627
  %v629 = vrcp.pop %v579
  %v630 = vmul.f32 %v579, %v629
  %v631 = vsub.f32 1.0, %v630
  %v632 = vmul.f32 %v629, %v631
  %v633 = vadd.f32 %v629, %v632
  %vm634 = vweird.f32 %v579
  %vm635 = vweird.f32 %v629
  %vm636 = vmor %vm634, %vm635
  %v637 = vsel %vm636, %v629, %v633
  %v638 = vand.u32 2147483647, %v579
  %vm639 = vcmp.eq.f32.partialorder %v638, 8.507059e+37
  %v640 = vand.u32 %v579, 2147483648
  %v641 = vor.u32 1.1754944e-38, %v640
  %v642 = vsel %vm639, %v641, %v637
  %v643 = vmul.f32 1.0, %v642
  %v644 = vrcp.pop %v580
  %v645 = vmul.f32 %v580, %v644
  %v646 = vsub.f32 1.0, %v645
  %v647 = vmul.f32 %v644, %v646
  %v648 = vadd.f32 %v644, %v647
  %vm649 = vweird.f32 %v580
  %vm650 = vweird.f32 %v644
  %vm651 = vmor %vm649, %vm650
  %v652 = vsel %vm651, %v644, %v648
  %v653 = vand.u32 2147483647, %v580
  %vm654 = vcmp.eq.f32.partialorder %v653, 8.507059e+37
  %v655 = vand.u32 %v580, 2147483648
  %v656 = vor.u32 1.1754944e-38, %v655
  %v657 = vsel %vm654, %v656, %v652
  %v658 = vmul.f32 1.0, %v657
  %v659 = vrcp.pop %v581
  %v660 = vmul.f32 %v581, %v659
  %v661 = vsub.f32 1.0, %v660
  %v662 = vmul.f32 %v659, %v661
  %v663 = vadd.f32 %v659, %v662
  %vm664 = vweird.f32 %v581
  %vm665 = vweird.f32 %v659
  %vm666 = vmor %vm664, %vm665
  %v667 = vsel %vm666, %v659, %v663
  %v668 = vand.u32 2147483647, %v581
  %vm669 = vcmp.eq.f32.partialorder %v668, 8.507059e+37
  %v670 = vand.u32 %v581, 2147483648
  %v671 = vor.u32 1.1754944e-38, %v670
  %v672 = vsel %vm669, %v671, %v667
  %v673 = vmul.f32 1.0, %v672
  %v674 = vrcp.pop %v582
  %v675 = vmul.f32 %v582, %v674
  %v676 = vsub.f32 1.0, %v675
  %v677 = vmul.f32 %v674, %v676
  %v678 = vadd.f32 %v674, %v677
  %vm679 = vweird.f32 %v582
  %vm680 = vweird.f32 %v674
  %vm681 = vmor %vm679, %vm680
  %v682 = vsel %vm681, %v674, %v678
  %v683 = vand.u32 2147483647, %v582
  %vm684 = vcmp.eq.f32.partialorder %v683, 8.507059e+37
  %v685 = vand.u32 %v582, 2147483648
  %v686 = vor.u32 1.1754944e-38, %v685
  %v687 = vsel %vm684, %v686, %v682
  %v688 = vmul.f32 1.0, %v687
  %v689 = vrcp.pop %v583
  %v690 = vmul.f32 %v583, %v689
  %v691 = vsub.f32 1.0, %v690
  %v692 = vmul.f32 %v689, %v691
  %v693 = vadd.f32 %v689, %v692
  %vm694 = vweird.f32 %v583
  %vm695 = vweird.f32 %v689
  %vm696 = vmor %vm694, %vm695
  %v697 = vsel %vm696, %v689, %v693
  %v698 = vand.u32 2147483647, %v583
  %vm699 = vcmp.eq.f32.partialorder %v698, 8.507059e+37
  %v700 = vand.u32 %v583, 2147483648
  %v701 = vor.u32 1.1754944e-38, %v700
  %v702 = vsel %vm699, %v701, %v697
  %v703 = vmul.f32 1.0, %v702
  %v704 = vmul.f32 %v478, %v598
  %v705 = vmul.f32 %v501, %v613
  %v706 = vmul.f32 %v524, %v628
  %v707 = vmul.f32 %v547, %v643
  %v708 = vmul.f32 %v481, %v658
  %v709 = vmul.f32 %v504, %v673
  %v710 = vmul.f32 %v527, %v688
  %v711 = vmul.f32 %v550, %v703
  %v712 = vld [vmem:[%s2] sm:$0xf]
  %v713 = vld [vmem:[%s3] sm:$0xf]
  %715 = vset.pattern.permute.xlu0 0
  %716 = vperm.xlu0 %715, %v713
  %v717 = vpop.permute.xlu0 %716
  %vm719 = vcmask 130048
  %v721 = vsel %vm719, %v712, 0
  %723 = vmatpush.msra.mxu0 0.0
  %724 = vmatpush.msra.mxu0 0.0
  %725 = vmatpush.msra.mxu0 0.0
  %726 = vmatpush.msra.mxu0 0.0
  %727 = vmatpush.msra.mxu0 0.0
  %728 = vmatpush.msra.mxu0 0.0
  %729 = vmatpush.msra.mxu0 0.0
  %730 = vmatpush.msra.mxu0 0.0
  %731 = vmatpush.msra.mxu0 0.0
  %732 = vmatpush.msra.mxu0 0.0
  %733 = vmatpush.msra.mxu0 0.0
  %734 = vmatpush.msra.mxu0 0.0
  %735 = vmatpush.msra.mxu0 0.0
  %736 = vmatpush.msra.mxu0 0.0
  %737 = vmatpush.msra.mxu0 %v708
  %738 = vmatpush.msra.mxu0 %v704
  %739 = vmatmul.f32.gmra.mxu0 %v721
  %v740 = vpop.f32.mrf.mxu0
  %v741 = vadd.f32 %v717, %v740
  %742 = vdwg.mxu0
  %743 = vmatpush.msra.mxu0 0.0
  %744 = vmatpush.msra.mxu0 0.0
  %745 = vmatpush.msra.mxu0 0.0
  %746 = vmatpush.msra.mxu0 0.0
  %747 = vmatpush.msra.mxu0 0.0
  %748 = vmatpush.msra.mxu0 0.0
  %749 = vmatpush.msra.mxu0 0.0
  %750 = vmatpush.msra.mxu0 0.0
  %751 = vmatpush.msra.mxu0 0.0
  %752 = vmatpush.msra.mxu0 0.0
  %753 = vmatpush.msra.mxu0 0.0
  %754 = vmatpush.msra.mxu0 0.0
  %755 = vmatpush.msra.mxu0 0.0
  %756 = vmatpush.msra.mxu0 0.0
  %757 = vmatpush.msra.mxu0 %v709
  %758 = vmatpush.msra.mxu0 %v705
  %759 = vmatmul.f32.gmra.mxu0 %v721
  %v760 = vpop.f32.mrf.mxu0
  %v761 = vadd.f32 %v717, %v760
  %762 = vdwg.mxu0
  %763 = vmatpush.msra.mxu0 0.0
  %764 = vmatpush.msra.mxu0 0.0
  %765 = vmatpush.msra.mxu0 0.0
  %766 = vmatpush.msra.mxu0 0.0
  %767 = vmatpush.msra.mxu0 0.0
  %768 = vmatpush.msra.mxu0 0.0
  %769 = vmatpush.msra.mxu0 0.0
  %770 = vmatpush.msra.mxu0 0.0
  %771 = vmatpush.msra.mxu0 0.0
  %772 = vmatpush.msra.mxu0 0.0
  %773 = vmatpush.msra.mxu0 0.0
  %774 = vmatpush.msra.mxu0 0.0
  %775 = vmatpush.msra.mxu0 0.0
  %776 = vmatpush.msra.mxu0 0.0
  %777 = vmatpush.msra.mxu0 %v710
  %778 = vmatpush.msra.mxu0 %v706
  %779 = vmatmul.f32.gmra.mxu0 %v721
  %v780 = vpop.f32.mrf.mxu0
  %v781 = vadd.f32 %v717, %v780
  %782 = vdwg.mxu0
  %783 = vmatpush.msra.mxu0 0.0
  %784 = vmatpush.msra.mxu0 0.0
  %785 = vmatpush.msra.mxu0 0.0
  %786 = vmatpush.msra.mxu0 0.0
  %787 = vmatpush.msra.mxu0 0.0
  %788 = vmatpush.msra.mxu0 0.0
  %789 = vmatpush.msra.mxu0 0.0
  %790 = vmatpush.msra.mxu0 0.0
  %791 = vmatpush.msra.mxu0 0.0
  %792 = vmatpush.msra.mxu0 0.0
  %793 = vmatpush.msra.mxu0 0.0
  %794 = vmatpush.msra.mxu0 0.0
  %795 = vmatpush.msra.mxu0 0.0
  %796 = vmatpush.msra.mxu0 0.0
  %797 = vmatpush.msra.mxu0 %v711
  %798 = vmatpush.msra.mxu0 %v707
  %799 = vmatmul.f32.gmra.mxu0 %v721
  %v800 = vpop.f32.mrf.mxu0
  %v801 = vadd.f32 %v717, %v800
  %802 = vdwg.mxu0
  %803 = vst [vmem:[#allocation1] ss:$2 sm:$0xff] %v17
  %s804 = scalar_lea.vmem [#allocation1], 16
  %805 = vst [vmem:[%s804] ss:$2 sm:$0xff] %v18
  %v806 = vld.sshfl [vmem:[#allocation1] sm:$0xff pattern:$0x75316420]
  %v807 = vld.sshfl [vmem:[#allocation1 + $0x8] sm:$0xff pattern:$0x75316420]
  %v808 = vld.sshfl [vmem:[#allocation1 + $0x10] sm:$0xff pattern:$0x75316420]
  %v809 = vld.sshfl [vmem:[#allocation1 + $0x18] sm:$0xff pattern:$0x75316420]
  %v814 = vadd.f32 %v741, %v806
  %v815 = vadd.f32 %v761, %v807
  %v816 = vadd.f32 %v781, %v808
  %v817 = vadd.f32 %v801, %v809
  %v822 = vrot.slane %v815, 4
  %v823 = vrot.slane %v817, 4
  %v824 = vsel %vm417, %v814, %v822
  %v825 = vsel %vm417, %v816, %v823
  %828 = vst [vmem:[%s4] sm:$0xff] %v824
  %829 = vst [vmem:[%s4 + $0x8] sm:$0xff] %v825
  // Predicated region
  $region18: #{fused_mbconv_forward.1} parent=0 // pred_check
    _
  $region19: #{fused_mbconv_forward.1} parent=0 // pred_check_branch
    %831 = sbr.rel (0) target = $region21
  $region20: #{fused_mbconv_forward.1} parent=0 // pred_region
    _
  $region21: #{fused_mbconv_forward.1} parent=0 // pred_fallthru
    _
  // Predicated region
  $region22: #{fused_mbconv_forward.1} parent=0 // pred_check
    _
  $region23: #{fused_mbconv_forward.1} parent=0 // pred_check_branch
    %833 = sbr.rel (0) target = $region25
  $region24: #{fused_mbconv_forward.1} parent=0 // pred_region
    _
  $region25: #{fused_mbconv_forward.1} parent=0 // pred_fallthru
    _

</llo_original>
